<compile_context>
chip_gen: v6e
topology: v6e:2x2x1
jax: 0.10.0
libtpu: 0.0.40
codegen_flags: <defaults>
</compile_context>

<pallas_src>
import functools

import jax
import jax.numpy as jnp
from jax import lax
from jax.experimental import pallas as pl
from jax.experimental.pallas import tpu as pltpu

_LANE = 128
_SUBLANE = 8
_CHUNK_ROWS = 64              # rows per inner fori step (8 vregs per f32 temp)
_MAX_BLOCK_ROWS = 8192        # 8192 * 128 * 4B = 4 MiB per f32 input block
_PAD_LOGIT = -1.0e4           # sigmoid -> 0, bce -> 0 exactly (exp underflows)


def _ce_focal_dice_kernel(pred_ref, true_ref, out_ref, *,
                          alpha, gamma, chunk, num_chunks, blk_rows,
                          valid_rows, ragged):
    """Streams one (blk_rows, 128) tile in `chunk`-row pieces, accumulating
    four (8, 128) partial sums: focal, bce, p*y, p+y."""
    row0 = pl.program_id(0) * blk_rows
    if ragged:
        iota_r = lax.broadcasted_iota(jnp.int32, (chunk, _LANE), 0)

    c0 = 1.0 - alpha            # trace-time Python constants
    c1 = 2.0 * alpha - 1.0

    def body(c, accs):
        acc_f, acc_b, acc_i, acc_u = accs
        start = pl.multiple_of(c * chunk, chunk)
        x = pred_ref[pl.ds(start, chunk), :].astype(jnp.float32)
        y = true_ref[pl.ds(start, chunk), :].astype(jnp.float32)
        if ragged:
            # Rows past the valid row count are Pallas OOB padding of the last
            # partial block (garbage). Mask BEFORE any accumulation so every
            # accumulated quantity is exactly zero there.
            valid = (iota_r + (row0 + start)) < valid_rows
            x = jnp.where(valid, x, _PAD_LOGIT)
            y = jnp.where(valid, y, 0.0)

        # Numerically-stable BCE-with-logits sharing one exp with the sigmoid:
        #   bce = max(x,0) - x*y + log1p(exp(-|x|))
        e = jnp.exp(-jnp.abs(x))                      # single EUP exp, reused
        bce = jnp.maximum(x, 0.0) - x * y + jnp.log1p(e)
        r = 1.0 / (1.0 + e)
        p = jnp.where(x >= 0, r, e * r)               # sigmoid(x)

        py = p * y                                    # dice intersection
        spy = p + y                                   # dice "union"
        one_m_pt = spy - 2.0 * py                     # == 1 - p_t
        alpha_factor = c0 + c1 * y                    # == y*a + (1-y)*(1-a)
        if gamma == 2:
            mod = one_m_pt * one_m_pt
        elif gamma == 1:
            mod = one_m_pt
        elif gamma == 0:
            mod = None
        else:
            mod = jnp.power(one_m_pt, jnp.float32(gamma))
        focal = bce * alpha_factor if mod is None else bce * alpha_factor * mod

        def fold(v):                                  # (chunk,128) -> (8,128)
            return jnp.sum(v.reshape(chunk // _SUBLANE, _SUBLANE, _LANE),
                           axis=0)

        return (acc_f + fold(focal), acc_b + fold(bce),
                acc_i + fold(py), acc_u + fold(spy))

    zeros = jnp.zeros((_SUBLANE, _LANE), jnp.float32)
    acc_f, acc_b, acc_i, acc_u = lax.fori_loop(
        0, num_chunks, body, (zeros, zeros, zeros, zeros))

    out_ref[0, 0] = acc_f      # partial sum of focal loss
    out_ref[0, 1] = acc_b      # partial sum of plain BCE
    out_ref[0, 2] = acc_i      # dice intersection (p*y)
    out_ref[0, 3] = acc_u      # dice union (p + y)


def ce_focal_dice_loss(pred, true, gamma=2, alpha=0.25, reduction="mean"):
    assert pred.shape == true.shape
    if reduction not in ("mean", "sum"):
        # TODO(synk): reduction='none' returns a full per-element focal tensor
        # plus broadcast scalars; not fused into this scalar-output kernel.
        raise NotImplementedError("reduction='none' is not supported")
    # TODO(synk): optional pos_weight of the wrapped BCEWithLogitsLoss is not
    # implemented (plain BCE assumed, matching the module defaults).

    n = pred.size
    flat_p = pred.reshape(-1)
    flat_t = true.reshape(-1)

    # Pad only to the next multiple of 8*128 = 1024 elements (no-op for most
    # real shapes). The ragged last *block* is handled in-kernel by masking,
    # so we never materialize a padded copy up to a block multiple.
    n_pad = -(-n // (_SUBLANE * _LANE)) * (_SUBLANE * _LANE)
    if n_pad != n:
        flat_p = jnp.pad(flat_p, (0, n_pad - n), constant_values=_PAD_LOGIT)
        flat_t = jnp.pad(flat_t, (0, n_pad - n))
    rows = n_pad // _LANE                       # multiple of 8

    if rows <= _CHUNK_ROWS:
        blk_rows = rows
        chunk = rows
    else:
        # Keep at least two grid steps when possible (v7x has 2 TensorCores),
        # cap the block at ~4 MiB per f32 input, whole number of chunks.
        target = min(_MAX_BLOCK_ROWS, -(-rows // 2))
        blk_rows = max(_CHUNK_ROWS, (target // _CHUNK_ROWS) * _CHUNK_ROWS)
        chunk = _CHUNK_ROWS
    grid_n = -(-rows // blk_rows)
    ragged = (rows % blk_rows) != 0

    p2 = flat_p.reshape(rows, _LANE)
    t2 = flat_t.reshape(rows, _LANE)

    kernel = functools.partial(
        _ce_focal_dice_kernel, alpha=float(alpha), gamma=gamma, chunk=chunk,
        num_chunks=blk_rows // chunk, blk_rows=blk_rows, valid_rows=rows,
        ragged=ragged)

    in_block_bytes = blk_rows * _LANE * (p2.dtype.itemsize + t2.dtype.itemsize)
    vmem_limit = int(min(2 * in_block_bytes + (8 << 20), 96 << 20))

    partials = pl.pallas_call(
        kernel,
        out_shape=jax.ShapeDtypeStruct((grid_n, 4, _SUBLANE, _LANE),
                                       jnp.float32),
        grid_spec=pltpu.PrefetchScalarGridSpec(
            num_scalar_prefetch=0,
            grid=(grid_n,),
            in_specs=[
                pl.BlockSpec((blk_rows, _LANE), lambda i: (i, 0)),
                pl.BlockSpec((blk_rows, _LANE), lambda i: (i, 0)),
            ],
            out_specs=pl.BlockSpec((1, 4, _SUBLANE, _LANE),
                                   lambda i: (i, 0, 0, 0)),
        ),
        compiler_params=pltpu.CompilerParams(
            dimension_semantics=("parallel",),
            vmem_limit_bytes=vmem_limit,
        ),
        cost_estimate=pl.CostEstimate(
            flops=22 * n,
            transcendentals=2 * n,
            bytes_accessed=n * (p2.dtype.itemsize + t2.dtype.itemsize)
                           + grid_n * 4 * _SUBLANE * _LANE * 4),
    )(p2, t2)

    sums = jnp.sum(partials, axis=(0, 2, 3))          # (4,)
    s_focal, s_bce, s_inter, s_union = sums[0], sums[1], sums[2], sums[3]

    f_loss = s_focal / jnp.float32(n) if reduction == "mean" else s_focal
    bce_mean = s_bce / jnp.float32(n)   # fresh BCEWithLogitsLoss() -> mean
    dice = 1.0 - (2.0 * s_inter + 1.0) / (s_union + 1.0)
    return (f_loss + dice + bce_mean).astype(jnp.float32)


def _reference(pred, true, gamma=2.0, alpha=0.25):
    x = pred.astype(jnp.float32)
    y = true.astype(jnp.float32)
    bce = jnp.maximum(x, 0.0) - x * y + jnp.log1p(jnp.exp(-jnp.abs(x)))
    p = jax.nn.sigmoid(x)
    p_t = y * p + (1.0 - y) * (1.0 - p)
    af = y * alpha + (1.0 - y) * (1.0 - alpha)
    mod = (1.0 - p_t) ** gamma
    f_loss = jnp.mean(bce * af * mod)
    iflat = p.reshape(-1)
    tflat = y.reshape(-1)
    inter = jnp.sum(iflat * tflat)
    dice = 1.0 - (2.0 * inter + 1.0) / (jnp.sum(iflat) + jnp.sum(tflat) + 1.0)
    return f_loss + dice + jnp.mean(bce)


if __name__ == "__main__":
    key = jax.random.PRNGKey(0)
    kp, kt, kp2, kt2 = jax.random.split(key, 4)

    # Small shape consistent with a detection-loss usage: NCHW logits + binary targets.
    pred = jax.random.normal(kp, (2, 4, 16, 16), dtype=jnp.float32)
    true = (jax.random.uniform(kt, (2, 4, 16, 16)) > 0.5).astype(jnp.float32)
    out = jax.block_until_ready(ce_focal_dice_loss(pred, true, gamma=2, alpha=0.25))
    ref = _reference(pred, true, gamma=2.0, alpha=0.25)
    assert jnp.allclose(out, ref, rtol=1e-5, atol=1e-6), (out, ref)

    # Second small check exercising multi-block grid + in-kernel ragged masking
    # (9216 elements -> 72 rows -> two 64-row blocks, last one partial).
    pred2 = jax.random.normal(kp2, (2, 4, 24, 48), dtype=jnp.float32)
    true2 = (jax.random.uniform(kt2, (2, 4, 24, 48)) > 0.5).astype(jnp.float32)
    out2 = jax.block_until_ready(ce_focal_dice_loss(pred2, true2, gamma=2, alpha=0.25))
    ref2 = _reference(pred2, true2, gamma=2.0, alpha=0.25)
    assert jnp.allclose(out2, ref2, rtol=1e-5, atol=1e-6), (out2, ref2)

    print("KERNEL_OK")
</pallas_src>

<mosaic_0001>
module attributes {stable_mosaic.version = 11 : i64} {
  func.func @_ce_focal_dice_kernel(%arg0: i32, %arg1: memref<16x128xf32, #tpu.memory_space<vmem>>, %arg2: memref<16x128xf32, #tpu.memory_space<vmem>>, %arg3: memref<1x4x8x128xf32, #tpu.memory_space<vmem>>) attributes {dimension_semantics = [#tpu.dimension_semantics<parallel>], iteration_bounds = array<i64: 1>, scalar_prefetch = 0 : i64, scratch_operands = 0 : i64, tpu.core_type = #tpu.core_type<tc>, window_params = [{transform_indices = @transform_0, window_bounds = array<i64: 16, 128>}, {transform_indices = @transform_1, window_bounds = array<i64: 16, 128>}, {transform_indices = @transform_2, window_bounds = array<i64: 1, 4, 8, 128>}]} {
    %cst = arith.constant 0.000000e+00 : f32
    %0 = vector.broadcast %cst : f32 to vector<8x128xf32>
    %c0_i32 = arith.constant 0 : i32
    %c16_i32 = arith.constant 16 : i32
    %1 = arith.muli %c0_i32, %c16_i32 : i32
    %2 = tpu.assume_multiple %1, 16 : i32
    %3 = arith.index_cast %2 : i32 to index
    %c0 = arith.constant 0 : index
    %4 = vector.load %arg1[%3, %c0] : memref<16x128xf32, #tpu.memory_space<vmem>>, vector<16x128xf32>
    %5 = arith.index_cast %2 : i32 to index
    %c0_0 = arith.constant 0 : index
    %6 = vector.load %arg2[%5, %c0_0] : memref<16x128xf32, #tpu.memory_space<vmem>>, vector<16x128xf32>
    %7 = math.absf %4 : vector<16x128xf32>
    %cst_1 = arith.constant 0.000000e+00 : f32
    %8 = vector.broadcast %cst_1 : f32 to vector<16x128xf32>
    %9 = arith.subf %8, %7 : vector<16x128xf32>
    %10 = math.exp %9 : vector<16x128xf32>
    %cst_2 = arith.constant 0.000000e+00 : f32
    %11 = vector.broadcast %cst_2 : f32 to vector<16x128xf32>
    %12 = arith.maximumf %4, %11 : vector<16x128xf32>
    %13 = arith.mulf %4, %6 : vector<16x128xf32>
    %14 = arith.subf %12, %13 : vector<16x128xf32>
    %15 = math.log1p %10 : vector<16x128xf32>
    %16 = arith.addf %14, %15 : vector<16x128xf32>
    %cst_3 = arith.constant 1.000000e+00 : f32
    %17 = vector.broadcast %cst_3 : f32 to vector<16x128xf32>
    %18 = arith.addf %17, %10 : vector<16x128xf32>
    %cst_4 = arith.constant 1.000000e+00 : f32
    %19 = vector.broadcast %cst_4 : f32 to vector<16x128xf32>
    %20 = arith.divf %19, %18 : vector<16x128xf32>
    %cst_5 = arith.constant 0.000000e+00 : f32
    %21 = vector.broadcast %cst_5 : f32 to vector<16x128xf32>
    %22 = arith.cmpf oge, %4, %21 : vector<16x128xf32>
    %23 = arith.mulf %10, %20 : vector<16x128xf32>
    %24 = arith.select %22, %20, %23 : vector<16x128xi1>, vector<16x128xf32>
    %25 = arith.mulf %24, %6 : vector<16x128xf32>
    %26 = arith.addf %24, %6 : vector<16x128xf32>
    %cst_6 = arith.constant 2.000000e+00 : f32
    %27 = vector.broadcast %cst_6 : f32 to vector<16x128xf32>
    %28 = arith.mulf %27, %25 : vector<16x128xf32>
    %29 = arith.subf %26, %28 : vector<16x128xf32>
    %cst_7 = arith.constant -5.000000e-01 : f32
    %30 = vector.broadcast %cst_7 : f32 to vector<16x128xf32>
    %31 = arith.mulf %30, %6 : vector<16x128xf32>
    %cst_8 = arith.constant 7.500000e-01 : f32
    %32 = vector.broadcast %cst_8 : f32 to vector<16x128xf32>
    %33 = arith.addf %32, %31 : vector<16x128xf32>
    %34 = arith.mulf %29, %29 : vector<16x128xf32>
    %35 = arith.mulf %16, %33 : vector<16x128xf32>
    %36 = arith.mulf %35, %34 : vector<16x128xf32>
    %37 = vector.shape_cast %36 : vector<16x128xf32> to vector<2x8x128xf32>
    %cst_9 = arith.constant dense<0.000000e+00> : vector<8x128xf32>
    %38 = vector.multi_reduction <add>, %37, %cst_9 [0] : vector<2x8x128xf32> to vector<8x128xf32>
    %39 = arith.addf %0, %38 : vector<8x128xf32>
    %40 = vector.shape_cast %16 : vector<16x128xf32> to vector<2x8x128xf32>
    %cst_10 = arith.constant dense<0.000000e+00> : vector<8x128xf32>
    %41 = vector.multi_reduction <add>, %40, %cst_10 [0] : vector<2x8x128xf32> to vector<8x128xf32>
    %42 = arith.addf %0, %41 : vector<8x128xf32>
    %43 = vector.shape_cast %25 : vector<16x128xf32> to vector<2x8x128xf32>
    %cst_11 = arith.constant dense<0.000000e+00> : vector<8x128xf32>
    %44 = vector.multi_reduction <add>, %43, %cst_11 [0] : vector<2x8x128xf32> to vector<8x128xf32>
    %45 = arith.addf %0, %44 : vector<8x128xf32>
    %46 = vector.shape_cast %26 : vector<16x128xf32> to vector<2x8x128xf32>
    %cst_12 = arith.constant dense<0.000000e+00> : vector<8x128xf32>
    %47 = vector.multi_reduction <add>, %46, %cst_12 [0] : vector<2x8x128xf32> to vector<8x128xf32>
    %48 = arith.addf %0, %47 : vector<8x128xf32>
    %c1_i32 = arith.constant 1 : i32
    %c0_13 = arith.constant 0 : index
    %c0_14 = arith.constant 0 : index
    %c0_15 = arith.constant 0 : index
    %c0_16 = arith.constant 0 : index
    %49 = vector.load %arg3[%c0_13, %c0_14, %c0_15, %c0_16] : memref<1x4x8x128xf32, #tpu.memory_space<vmem>>, vector<1x1x8x128xf32>
    %50 = vector.shape_cast %49 : vector<1x1x8x128xf32> to vector<8x128xf32>
    %51 = vector.shape_cast %39 : vector<8x128xf32> to vector<1x1x8x128xf32>
    tpu.vector_store %arg3[%c0_13, %c0_14, %c0_15, %c0_16], %51 {strides = array<i32>} : memref<1x4x8x128xf32, #tpu.memory_space<vmem>>, vector<1x1x8x128xf32>,
    %c0_17 = arith.constant 0 : index
    %c1 = arith.constant 1 : index
    %c0_18 = arith.constant 0 : index
    %c0_19 = arith.constant 0 : index
    %52 = vector.load %arg3[%c0_17, %c1, %c0_18, %c0_19] : memref<1x4x8x128xf32, #tpu.memory_space<vmem>>, vector<1x1x8x128xf32>
    %53 = vector.shape_cast %52 : vector<1x1x8x128xf32> to vector<8x128xf32>
    %54 = vector.shape_cast %42 : vector<8x128xf32> to vector<1x1x8x128xf32>
    tpu.vector_store %arg3[%c0_17, %c1, %c0_18, %c0_19], %54 {strides = array<i32>} : memref<1x4x8x128xf32, #tpu.memory_space<vmem>>, vector<1x1x8x128xf32>,
    %c0_20 = arith.constant 0 : index
    %c2 = arith.constant 2 : index
    %c0_21 = arith.constant 0 : index
    %c0_22 = arith.constant 0 : index
    %55 = vector.load %arg3[%c0_20, %c2, %c0_21, %c0_22] : memref<1x4x8x128xf32, #tpu.memory_space<vmem>>, vector<1x1x8x128xf32>
    %56 = vector.shape_cast %55 : vector<1x1x8x128xf32> to vector<8x128xf32>
    %57 = vector.shape_cast %45 : vector<8x128xf32> to vector<1x1x8x128xf32>
    tpu.vector_store %arg3[%c0_20, %c2, %c0_21, %c0_22], %57 {strides = array<i32>} : memref<1x4x8x128xf32, #tpu.memory_space<vmem>>, vector<1x1x8x128xf32>,
    %c0_23 = arith.constant 0 : index
    %c3 = arith.constant 3 : index
    %c0_24 = arith.constant 0 : index
    %c0_25 = arith.constant 0 : index
    %58 = vector.load %arg3[%c0_23, %c3, %c0_24, %c0_25] : memref<1x4x8x128xf32, #tpu.memory_space<vmem>>, vector<1x1x8x128xf32>
    %59 = vector.shape_cast %58 : vector<1x1x8x128xf32> to vector<8x128xf32>
    %60 = vector.shape_cast %48 : vector<8x128xf32> to vector<1x1x8x128xf32>
    tpu.vector_store %arg3[%c0_23, %c3, %c0_24, %c0_25], %60 {strides = array<i32>} : memref<1x4x8x128xf32, #tpu.memory_space<vmem>>, vector<1x1x8x128xf32>,
    return
  }
  func.func @transform_0(%arg0: i32) -> (i32, i32) {
    %c0_i32 = arith.constant 0 : i32
    %c0_i32_0 = arith.constant 0 : i32
    return %arg0, %c0_i32 : i32, i32
  }
  func.func @transform_1(%arg0: i32) -> (i32, i32) {
    %c0_i32 = arith.constant 0 : i32
    %c0_i32_0 = arith.constant 0 : i32
    return %arg0, %c0_i32 : i32, i32
  }
  func.func @transform_2(%arg0: i32) -> (i32, i32, i32, i32) {
    %c0_i32 = arith.constant 0 : i32
    %c0_i32_0 = arith.constant 0 : i32
    %c0_i32_1 = arith.constant 0 : i32
    %c0_i32_2 = arith.constant 0 : i32
    return %arg0, %c0_i32, %c0_i32_0, %c0_i32_1 : i32, i32, i32, i32
  }
}

</mosaic_0001>

<llo_original>
// kernel: tpu_custom_call.1
$region0: #{tpu_custom_call.1}
  #allocation0 [shape = 'u32[]', space=smem, size = 0x4, offset = 0x4, fixed_abs, tag = 'smem constant byte address 0x4 - core index']
  #allocation1 [shape = 'u32[144,128]{1,0:T(1,128)}', space=vmem, size = 0x12000, scoped, tag = 'internal scratch']
  %s0 = inlined_call_operand.hbm [shape: f32[16,128], index: 0, kind: input, shape index: {}]
  %s1 = inlined_call_operand.hbm [shape: f32[16,128], index: 1, kind: input, shape index: {}]
  %s2 = inlined_call_operand.hbm [shape: f32[1,4,8,128], index: 2, kind: output, shape index: {}]
  %s3 = sld [smem:[#allocation0]]
  $region26: #{tpu_custom_call.1} parent=0
    _
  %s5 = ssub.s32 1, %s3
  %s6 = scalar_select 0, %s5, %s3
  $region1: #{tpu_custom_call.1} parent=0
    #allocation2 [shape = 'u8[8192]{0}', space=vmem, size = 0x2000, scoped, tag = 'input window, operand 0, single buffered']
    #allocation3 [shape = 's32[1]{0}', space=sflag, size = 0x4, scoped, tag = 'scoped memory for tpu_custom_call.1']
    #allocation4 [shape = 's32[1]{0}', space=sflag, size = 0x4, scoped, tag = 'scoped memory for tpu_custom_call.1']
    #allocation5 [shape = 'u8[8192]{0}', space=vmem, size = 0x2000, scoped, tag = 'input window, operand 1, single buffered']
    #allocation6 [shape = 's32[1]{0}', space=sflag, size = 0x4, scoped, tag = 'scoped memory for tpu_custom_call.1']
    #allocation7 [shape = 'u8[16384]{0}', space=vmem, size = 0x4000, scoped, tag = 'output window, operand 0, single buffered']
    %7 = vsyncpa [#allocation3], 0
    %8 = vsyncpa [#allocation6], 0
    %9 = vsyncpa [#allocation4], 0
    // Predicated region
    $region2: #{tpu_custom_call.1} parent=1 // pred_check
      _
    $region3: #{tpu_custom_call.1} parent=1 // pred_check_branch
      %11 = sbr.rel (0) target = $region5
    $region4: #{tpu_custom_call.1} parent=1 // pred_region
      %s13 = ssub.s32 256, 256
      %14 = vsyncadd [#allocation3], %s13
      %s15 = sshll.u32 [#allocation2], 4
      %s16 = int_to_ptr.vmem [resolvable:$true] %s15
      %21 = dma.hbm_to_vmem [thread:$0]  %s0, 256, %s16, [#allocation3], 128, 128, 8
    $region5: #{tpu_custom_call.1} parent=1 // pred_fallthru
      _
    // Predicated region
    $region6: #{tpu_custom_call.1} parent=1 // pred_check
      _
    $region7: #{tpu_custom_call.1} parent=1 // pred_check_branch
      %23 = sbr.rel (0) target = $region9
    $region8: #{tpu_custom_call.1} parent=1 // pred_region
      %s25 = ssub.s32 256, 256
      %26 = vsyncadd [#allocation6], %s25
      %s27 = sshll.u32 [#allocation5], 4
      %s28 = int_to_ptr.vmem [resolvable:$true] %s27
      %33 = dma.hbm_to_vmem [thread:$0]  %s1, 256, %s28, [#allocation6], 128, 128, 8
    $region9: #{tpu_custom_call.1} parent=1 // pred_fallthru
      _
    // Predicated region
    $region10: #{tpu_custom_call.1} parent=1 // pred_check
      _
    $region11: #{tpu_custom_call.1} parent=1 // pred_check_branch
      %35 = sbr.rel (0) target = $region13
    $region12: #{tpu_custom_call.1} parent=1 // pred_region
      %36 = dma.done [#allocation3], 256
    $region13: #{tpu_custom_call.1} parent=1 // pred_fallthru
      _
    // Predicated region
    $region14: #{tpu_custom_call.1} parent=1 // pred_check
      _
    $region15: #{tpu_custom_call.1} parent=1 // pred_check_branch
      %38 = sbr.rel (0) target = $region17
    $region16: #{tpu_custom_call.1} parent=1 // pred_region
      %39 = dma.done [#allocation6], 256
    $region17: #{tpu_custom_call.1} parent=1 // pred_fallthru
      _
    %v40 = vld [vmem:[#allocation2] sm:$0xff]
    %v41 = vld [vmem:[#allocation2 + $0x8] sm:$0xff]
    %v42 = vld [vmem:[#allocation5] sm:$0xff]
    %v43 = vld [vmem:[#allocation5 + $0x8] sm:$0xff]
    %v44 = vand.u32 2147483647, %v40
    %v45 = vand.u32 2147483647, %v41
    %v46 = vsub.f32 0.0, %v44
    %v47 = vsub.f32 0.0, %v45
    %v48 = vmul.f32 %v46, 1.442695
    %v49 = vpow.pop %v48
    %v50 = vmul.f32 %v47, 1.442695
    %v51 = vpow.pop %v50
    %v52 = vmax.f32 %v40, 0.0
    %v53 = vmax.f32 %v41, 0.0
    %v54 = vmul.f32 %v40, %v42
    %v55 = vmul.f32 %v41, %v43
    %v56 = vsub.f32 %v52, %v54
    %v57 = vsub.f32 %v53, %v55
    %v58 = vadd.f32 %v49, 1.0
    %v59 = vlog2.pop %v58
    %v60 = vmul.f32 %v59, 0.6931472
    %v61 = vmul.f32 -0.5, %v49
    %v62 = vadd.f32 %v61, 1.0
    %v63 = vmul.f32 %v62, %v49
    %v64 = vand.u32 2147483647, %v49
    %vm65 = vcmp.lt.f32.partialorder %v64, 0.0004427343
    %v66 = vsel %vm65, %v63, %v60
    %v67 = vadd.f32 %v51, 1.0
    %v68 = vlog2.pop %v67
    %v69 = vmul.f32 %v68, 0.6931472
    %v70 = vmul.f32 -0.5, %v51
    %v71 = vadd.f32 %v70, 1.0
    %v72 = vmul.f32 %v71, %v51
    %v73 = vand.u32 2147483647, %v51
    %vm74 = vcmp.lt.f32.partialorder %v73, 0.0004427343
    %v75 = vsel %vm74, %v72, %v69
    %v76 = vadd.f32 %v56, %v66
    %v77 = vadd.f32 %v57, %v75
    %v78 = vadd.f32 %v49, 1.0
    %v79 = vadd.f32 %v51, 1.0
    %v80 = vrcp.pop %v78
    %v81 = vmul.f32 1.0, %v80
    %v82 = vrcp.pop %v79
    %v83 = vmul.f32 1.0, %v82
    %vm84 = vcmp.ge.f32.partialorder %v40, 0.0
    %vm85 = vcmp.ge.f32.partialorder %v41, 0.0
    %v86 = vmul.f32 %v49, %v81
    %v87 = vmul.f32 %v51, %v83
    %v88 = vsel %vm84, %v81, %v86
    %v89 = vsel %vm85, %v83, %v87
    %v90 = vmul.f32 %v88, %v42
    %v91 = vmul.f32 %v89, %v43
    %v92 = vadd.f32 %v88, %v42
    %v93 = vadd.f32 %v89, %v43
    %v94 = vmul.f32 %v90, 2.0
    %v95 = vmul.f32 %v91, 2.0
    %v96 = vsub.f32 %v92, %v94
    %v97 = vsub.f32 %v93, %v95
    %v98 = vmul.f32 %v42, -0.5
    %v99 = vmul.f32 %v43, -0.5
    %v100 = vadd.f32 %v98, 0.75
    %v101 = vadd.f32 %v99, 0.75
    %v102 = vmul.f32 %v96, %v96
    %v103 = vmul.f32 %v97, %v97
    %v104 = vmul.f32 %v76, %v100
    %v105 = vmul.f32 %v77, %v101
    %v106 = vmul.f32 %v104, %v102
    %v107 = vmul.f32 %v105, %v103
    %v108 = vadd.f32 %v106, %v107
    %v109 = vadd.f32 %v108, 0.0
    %v110 = vadd.f32 %v76, %v77
    %v111 = vadd.f32 %v110, 0.0
    %v112 = vadd.f32 %v90, %v91
    %v113 = vadd.f32 %v112, 0.0
    %v114 = vadd.f32 %v92, %v93
    %v115 = vadd.f32 %v114, 0.0
    %116 = vst [vmem:[#allocation7] sm:$0xff] %v109
    %s117 = scalar_lea.vmem [#allocation7], 8
    %118 = vst [vmem:[%s117] sm:$0xff] %v111
    %s119 = scalar_lea.vmem [#allocation7], 16
    %120 = vst [vmem:[%s119] sm:$0xff] %v113
    %s121 = scalar_lea.vmem [#allocation7], 24
    %122 = vst [vmem:[%s121] sm:$0xff] %v115
    // Predicated region
    $region18: #{tpu_custom_call.1} parent=1 // pred_check
      _
    $region19: #{tpu_custom_call.1} parent=1 // pred_check_branch
      %124 = sbr.rel (0) target = $region21
    $region20: #{tpu_custom_call.1} parent=1 // pred_region
      %s126 = ssub.s32 512, 512
      %127 = vsyncadd [#allocation4], %s126
      %s128 = sshll.u32 [#allocation7], 4
      %s129 = int_to_ptr.vmem [resolvable:$true] %s128
      %134 = dma.vmem_to_hbm [thread:$0]  %s129, 512, %s2, [#allocation4], 128, 128, 8
    $region21: #{tpu_custom_call.1} parent=1 // pred_fallthru
      _
    // Predicated region
    $region22: #{tpu_custom_call.1} parent=1 // pred_check
      _
    $region23: #{tpu_custom_call.1} parent=1 // pred_check_branch
      %136 = sbr.rel (0) target = $region25
    $region24: #{tpu_custom_call.1} parent=1 // pred_region
      %137 = dma.done [#allocation4], 512
    $region25: #{tpu_custom_call.1} parent=1 // pred_fallthru
      _
    %138 = vsyncpa [#allocation3], 1
    %139 = vsyncpa [#allocation6], 1
    %140 = vsyncpa [#allocation4], 1

</llo_original>
